<compile_context>
chip_gen: v7x
topology: tpu7x:2x2x1
jax: 0.10.0
libtpu: 0.0.40
codegen_flags: <defaults>
</compile_context>

<pallas_src>
import functools

import jax
import jax.numpy as jnp
from jax import lax
from jax.experimental import pallas as pl
from jax.experimental.pallas import tpu as pltpu

A_BITS = 4                        # deterministic "parameter" from __init__(a_bits)
Q_RANGE = float(2 ** A_BITS - 1)  # self.q_range = 2**a_bits - 1
_EPS = 1e-30                      # guard against alpha == 0

_LANES = 128
_SUBLANES = 8
_TILE_ROWS = 8192                 # (8192, 128) f32 block = 4 MiB per streaming block
_STREAM_VMEM_LIMIT = 48 * 1024 * 1024
_MAXABS_SPLITS = 2                # megacore split for v7x; harmless on v5e/v6e


def _round_up(a, b):
    return ((a + b - 1) // b) * b


def _vmem_capacity_bytes():
    try:
        return int(pltpu.get_tpu_info().vmem_capacity_bytes)
    except Exception:
        return 64 * 1024 * 1024   # conservative fallback (v7x per-TC VMEM)


_VMEM_BYTES = _vmem_capacity_bytes()
_FUSED_VMEM_LIMIT = min(_VMEM_BYTES * 3 // 4, 96 * 1024 * 1024)   # 96 MiB v5e/v6e, 48 MiB v7x
_FUSED_MAX_BYTES = _FUSED_VMEM_LIMIT // 10                        # ~9.6 MiB v5e/v6e, ~4.8 MiB v7x


def _to_slab(x):
    """View x as a lane-dense (rows, 128) slab.

    Zero-copy reshape when x.size % 128 == 0; only ragged sizes pay a pad copy."""
    n = x.size
    flat = x.reshape(-1)
    if n % _LANES != 0:
        flat = jnp.pad(flat, (0, _round_up(n, _LANES) - n))
    rows = flat.shape[0] // _LANES
    return flat.reshape(rows, _LANES), rows


def _from_slab(q, n, shape):
    if q.size == n:                 # zero-copy path: no un-slice needed
        return q.reshape(shape)
    return q.reshape(-1)[:n].reshape(shape)


# ---------------------------------------------------------------------------
# Fused kernel (small/medium activations): alpha = max|x| and quantize in one
# pass over a single full-slab block (one HBM read of x + one write).
# ---------------------------------------------------------------------------
def _fused_kernel(x_ref, o_ref, alpha_ref):
    x = x_ref[...]
    # max is exact in the native dtype -> no full-slab f32 temp for the reduction.
    alpha = jnp.max(jnp.abs(x)).astype(jnp.float32)
    alpha_ref[0, 0] = alpha
    safe = jnp.maximum(alpha, _EPS)
    scale = Q_RANGE / safe            # single scalar divide
    inv_scale = safe / Q_RANGE
    tmp = jnp.clip(x.astype(jnp.float32), 0.0, safe)
    # Round(t) = sign(t)*floor(|t|+0.5); tmp >= 0 so it is floor(t + 0.5).
    o_ref[...] = (jnp.floor(tmp * scale + 0.5) * inv_scale).astype(o_ref.dtype)


def _pact_fused(x):
    shape, dtype, n = x.shape, x.dtype, x.size
    slab, _ = _to_slab(x)
    q, alpha = pl.pallas_call(
        _fused_kernel,
        out_shape=(
            jax.ShapeDtypeStruct(slab.shape, dtype),
            jax.ShapeDtypeStruct((1, 1), jnp.float32),
        ),
        grid_spec=pltpu.PrefetchScalarGridSpec(
            num_scalar_prefetch=0,
            grid=(1,),
            in_specs=[pl.BlockSpec(slab.shape, lambda i: (0, 0))],
            out_specs=(
                pl.BlockSpec(slab.shape, lambda i: (0, 0)),
                pl.BlockSpec((1, 1), lambda i: (0, 0), memory_space=pltpu.SMEM),
            ),
        ),
        compiler_params=pltpu.CompilerParams(
            dimension_semantics=("arbitrary",),
            vmem_limit_bytes=_FUSED_VMEM_LIMIT,
        ),
    )(slab)
    return _from_slab(q, n, shape), alpha[0, 0]


# ---------------------------------------------------------------------------
# Kernel 1 (large activations): global max(|x|).
# Grid = (splits, tiles_per_split); leading axis is "parallel" so both v7x
# TensorCores stream HBM; each split keeps a (1,128) VMEM vector accumulator
# and emits a scalar partial max, reduced in the wrapper.
# Partial last tile is masked with an iota row mask (abs >= 0, so 0 is neutral).
# ---------------------------------------------------------------------------
def _maxabs_kernel(x_ref, part_ref, acc_ref, *, rows, tile_rows,
                   tiles_per_split, num_tiles):
    i = pl.program_id(1)

    @pl.when(i == 0)
    def _():
        acc_ref[...] = jnp.zeros_like(acc_ref)

    g = jnp.minimum(pl.program_id(0) * tiles_per_split + i, num_tiles - 1)
    valid = rows - g * tile_rows          # >= 1 valid rows in this tile
    row_ids = lax.broadcasted_iota(jnp.int32, x_ref.shape, 0)
    x = x_ref[...]
    ax = jnp.where(row_ids < valid, jnp.abs(x), jnp.zeros_like(x))
    acc_ref[...] = jnp.maximum(
        acc_ref[...], jnp.max(ax, axis=0, keepdims=True).astype(jnp.float32))

    @pl.when(i == tiles_per_split - 1)
    def _():
        part_ref[0, 0] = jnp.max(acc_ref[...])


def pact_max_abs(x):
    """alpha init: activation.abs().max() -> scalar f32."""
    slab, rows = _to_slab(x)
    tile_rows = min(_TILE_ROWS, _round_up(rows, _SUBLANES))
    num_tiles = pl.cdiv(rows, tile_rows)
    splits = min(_MAXABS_SPLITS, num_tiles)
    tps = pl.cdiv(num_tiles, splits)

    kernel = functools.partial(_maxabs_kernel, rows=rows, tile_rows=tile_rows,
                               tiles_per_split=tps, num_tiles=num_tiles)
    partials = pl.pallas_call(
        kernel,
        out_shape=jax.ShapeDtypeStruct((splits, 1), jnp.float32),
        grid_spec=pltpu.PrefetchScalarGridSpec(
            num_scalar_prefetch=0,
            grid=(splits, tps),
            in_specs=[pl.BlockSpec(
                (tile_rows, _LANES),
                lambda c, i: (jnp.minimum(c * tps + i, num_tiles - 1), 0))],
            out_specs=pl.BlockSpec((1, 1), lambda c, i: (c, 0),
                                   memory_space=pltpu.SMEM),
            scratch_shapes=[pltpu.VMEM((1, _LANES), jnp.float32)],
        ),
        compiler_params=pltpu.CompilerParams(
            dimension_semantics=("parallel", "arbitrary"),
            vmem_limit_bytes=_STREAM_VMEM_LIMIT,
        ),
    )(slab)
    return jnp.max(partials)


# ---------------------------------------------------------------------------
# Kernel 2 (large activations / alpha provided): PACT quantization.
#   tmp = clip(x, 0, alpha);  q = floor(tmp * q_range/alpha + 0.5) * alpha/q_range
# Partial last block is safe: OOB output lanes/rows are dropped on writeback.
# ---------------------------------------------------------------------------
def _quantize_kernel(alpha_ref, x_ref, o_ref):
    alpha = jnp.maximum(alpha_ref[0, 0], _EPS)
    scale = Q_RANGE / alpha           # one scalar divide per grid step
    inv_scale = alpha / Q_RANGE
    tmp = jnp.clip(x_ref[...].astype(jnp.float32), 0.0, alpha)
    o_ref[...] = (jnp.floor(tmp * scale + 0.5) * inv_scale).astype(o_ref.dtype)


def pact_quantize(x, alpha):
    shape, dtype, n = x.shape, x.dtype, x.size
    slab, rows = _to_slab(x)
    tile_rows = min(_TILE_ROWS, _round_up(rows, _SUBLANES))
    num_tiles = pl.cdiv(rows, tile_rows)
    alpha2d = jnp.asarray(alpha, jnp.float32).reshape(1, 1)
    q = pl.pallas_call(
        _quantize_kernel,
        out_shape=jax.ShapeDtypeStruct(slab.shape, dtype),
        grid_spec=pltpu.PrefetchScalarGridSpec(
            num_scalar_prefetch=0,
            grid=(num_tiles,),
            in_specs=[
                pl.BlockSpec((1, 1), lambda i: (0, 0), memory_space=pltpu.SMEM),
                pl.BlockSpec((tile_rows, _LANES), lambda i: (i, 0)),
            ],
            out_specs=pl.BlockSpec((tile_rows, _LANES), lambda i: (i, 0)),
        ),
        compiler_params=pltpu.CompilerParams(
            dimension_semantics=("parallel",),
            vmem_limit_bytes=_STREAM_VMEM_LIMIT,
        ),
    )(alpha2d, slab)
    return _from_slab(q, n, shape)


def pact_activation_quantizer_forward(activation, alpha=None):
    """Mirrors PactActivationQuantizer.forward.
    First call (alpha is None): alpha := max(|activation|), then PACT-quantize.
    Later calls: use the provided alpha. Returns (q_a, alpha_scalar)."""
    if alpha is None:
        if activation.size * activation.dtype.itemsize <= _FUSED_MAX_BYTES:
            q, a = _pact_fused(activation)       # one HBM read + one write, one launch
            return q, a
        alpha = pact_max_abs(activation)
    alpha = jnp.asarray(alpha, jnp.float32).reshape(())
    return pact_quantize(activation, alpha), alpha


# ---------------------------------------------------------------------------
# Pure-JAX reference (same op order as the kernels for bit-comparable output).
# ---------------------------------------------------------------------------
def _reference(x, alpha=None):
    xf = x.astype(jnp.float32)
    if alpha is None:
        alpha = jnp.max(jnp.abs(xf))
    alpha = jnp.maximum(jnp.asarray(alpha, jnp.float32), _EPS)
    scale = Q_RANGE / alpha
    inv_scale = alpha / Q_RANGE
    tmp = jnp.clip(xf, 0.0, alpha)
    return (jnp.floor(tmp * scale + 0.5) * inv_scale).astype(x.dtype)


def _check_quant(q, ref, alpha):
    step = float(alpha) / Q_RANGE
    diff = jnp.abs(q.astype(jnp.float32) - ref.astype(jnp.float32))
    # Results should be (nearly) bit-identical; tolerate at most one
    # quantization level on a vanishing fraction of exact rounding ties.
    assert float(jnp.max(diff)) <= step + 1e-5
    assert float(jnp.mean((diff > 1e-5).astype(jnp.float32))) < 1e-4


if __name__ == "__main__":
    key = jax.random.PRNGKey(0)
    k1, k2, k3 = jax.random.split(key, 3)

    # --- small NCHW activation (fused single-pass path), first-call semantics ---
    x = jax.random.normal(k1, (2, 4, 16, 16), dtype=jnp.float32)
    q_a, alpha = pact_activation_quantizer_forward(x)
    q_a = jax.block_until_ready(q_a)
    alpha = jax.block_until_ready(alpha)
    assert q_a.shape == x.shape and q_a.dtype == x.dtype
    assert jnp.allclose(alpha, jnp.max(jnp.abs(x)), rtol=0, atol=1e-6)
    _check_quant(q_a, _reference(x), alpha)

    # --- second call: reuse alpha (quantize-only path) ---
    q_b, _ = pact_activation_quantizer_forward(x, alpha)
    q_b = jax.block_until_ready(q_b)
    _check_quant(q_b, _reference(x, alpha), alpha)

    # --- ragged size (not a multiple of 128): exercises the pad fallback ---
    xr = jax.random.normal(k2, (3, 5, 7, 11), dtype=jnp.float32)
    q_r, alpha_r = pact_activation_quantizer_forward(xr)
    q_r = jax.block_until_ready(q_r)
    assert q_r.shape == xr.shape
    assert jnp.allclose(alpha_r, jnp.max(jnp.abs(xr)), rtol=0, atol=1e-6)
    _check_quant(q_r, _reference(xr), alpha_r)

    # --- larger activation: tiled two-pass path, megacore split, masked last tile ---
    xl = jax.random.normal(k3, (9, 50, 128, 128), dtype=jnp.float32)  # ~28 MiB
    q_l, alpha_l = pact_activation_quantizer_forward(xl)
    q_l = jax.block_until_ready(q_l)
    alpha_l = jax.block_until_ready(alpha_l)
    assert jnp.allclose(alpha_l, jnp.max(jnp.abs(xl)), rtol=0, atol=1e-6)
    _check_quant(q_l, _reference(xl), alpha_l)

    print("KERNEL_OK")
</pallas_src>

<mosaic_0001>
module attributes {stable_mosaic.version = 11 : i64} {
  func.func @_fused_kernel(%arg0: i32, %arg1: memref<16x128xf32, #tpu.memory_space<vmem>>, %arg2: memref<16x128xf32, #tpu.memory_space<vmem>>, %arg3: memref<1x1xf32, #tpu.memory_space<smem>>) attributes {dimension_semantics = [#tpu.dimension_semantics<arbitrary>], iteration_bounds = array<i64: 1>, scalar_prefetch = 0 : i64, scratch_operands = 0 : i64, tpu.core_type = #tpu.core_type<tc>, window_params = [{pipeline_mode = #tpu.pipeline_mode<synchronous>, transform_indices = @transform_0, window_bounds = array<i64: 16, 128>}, {pipeline_mode = #tpu.pipeline_mode<synchronous>, transform_indices = @transform_1, window_bounds = array<i64: 16, 128>}, {transform_indices = @transform_2, window_bounds = array<i64: 1, 1>}]} {
    %c0 = arith.constant 0 : index
    %c0_0 = arith.constant 0 : index
    %0 = vector.load %arg1[%c0, %c0_0] : memref<16x128xf32, #tpu.memory_space<vmem>>, vector<16x128xf32>
    %1 = math.absf %0 : vector<16x128xf32>
    %2 = vector.shape_cast %1 : vector<16x128xf32> to vector<1x16x128xf32>
    %cst = arith.constant dense<0xFF800000> : vector<1xf32>
    %3 = vector.multi_reduction <maximumf>, %2, %cst [1, 2] : vector<1x16x128xf32> to vector<1xf32>
    %4 = vector.shape_cast %3 : vector<1xf32> to vector<1x1x1xf32>
    %5 = vector.extract %4[0, 0, 0] : f32 from vector<1x1x1xf32>
    %c0_1 = arith.constant 0 : index
    %c0_2 = arith.constant 0 : index
    %6 = memref.load %arg3[%c0_1, %c0_2] : memref<1x1xf32, #tpu.memory_space<smem>>
    memref.store %5, %arg3[%c0_1, %c0_2] : memref<1x1xf32, #tpu.memory_space<smem>>
    %cst_3 = arith.constant 1.000000e-30 : f32
    %7 = arith.maximumf %5, %cst_3 : f32
    %cst_4 = arith.constant 1.500000e+01 : f32
    %8 = arith.divf %cst_4, %7 : f32
    %cst_5 = arith.constant 1.500000e+01 : f32
    %9 = arith.divf %7, %cst_5 : f32
    %cst_6 = arith.constant 0.000000e+00 : f32
    %10 = vector.broadcast %cst_6 : f32 to vector<16x128xf32>
    %11 = arith.maximumf %10, %0 : vector<16x128xf32>
    %12 = vector.broadcast %7 : f32 to vector<16x128xf32>
    %13 = arith.minimumf %12, %11 : vector<16x128xf32>
    %14 = vector.broadcast %8 : f32 to vector<16x128xf32>
    %15 = arith.mulf %13, %14 : vector<16x128xf32>
    %cst_7 = arith.constant 5.000000e-01 : f32
    %16 = vector.broadcast %cst_7 : f32 to vector<16x128xf32>
    %17 = arith.addf %15, %16 : vector<16x128xf32>
    %18 = math.floor %17 : vector<16x128xf32>
    %19 = vector.broadcast %9 : f32 to vector<16x128xf32>
    %20 = arith.mulf %18, %19 : vector<16x128xf32>
    %c0_8 = arith.constant 0 : index
    %c0_9 = arith.constant 0 : index
    %21 = vector.load %arg2[%c0_8, %c0_9] : memref<16x128xf32, #tpu.memory_space<vmem>>, vector<16x128xf32>
    tpu.vector_store %arg2[%c0_8, %c0_9], %20 {strides = array<i32>} : memref<16x128xf32, #tpu.memory_space<vmem>>, vector<16x128xf32>,
    return
  }
  func.func @transform_0(%arg0: i32) -> (i32, i32) {
    %c0_i32 = arith.constant 0 : i32
    %c0_i32_0 = arith.constant 0 : i32
    %c0_i32_1 = arith.constant 0 : i32
    return %c0_i32, %c0_i32_0 : i32, i32
  }
  func.func @transform_1(%arg0: i32) -> (i32, i32) {
    %c0_i32 = arith.constant 0 : i32
    %c0_i32_0 = arith.constant 0 : i32
    %c0_i32_1 = arith.constant 0 : i32
    return %c0_i32, %c0_i32_0 : i32, i32
  }
  func.func @transform_2(%arg0: i32) -> (i32, i32) {
    %c0_i32 = arith.constant 0 : i32
    %c0_i32_0 = arith.constant 0 : i32
    %c0_i32_1 = arith.constant 0 : i32
    return %c0_i32, %c0_i32_0 : i32, i32
  }
}

</mosaic_0001>

<llo_original>
// kernel: tpu_custom_call.1
$region0: #{tpu_custom_call.1}
  #allocation0 [shape = 'u32[]', space=smem, size = 0x4, offset = 0x4, fixed_abs, tag = 'smem constant byte address 0x4 - core index']
  #allocation1 [shape = 'u32[144,128]{1,0:T(1,128)}', space=vmem, size = 0x12000, scoped, tag = 'internal scratch']
  %s0 = inlined_call_operand.hbm [shape: f32[16,128], index: 0, kind: input, shape index: {}]
  %s1 = inlined_call_operand.hbm [shape: f32[16,128], index: 1, kind: output, shape index: {0}]
  %s2 = inlined_call_operand.hbm [shape: f32[1,1], index: 2, kind: output, shape index: {1}]
  %3 = xla_tuple %s1, %s2
  %s4 = sld [smem:[#allocation0]]
  $region26: #{tpu_custom_call.1} parent=0
    _
  %s6 = ssub.s32 1, %s4
  %s7 = scalar_select 0, %s6, %s4
  $region1: #{tpu_custom_call.1} parent=0
    #allocation2 [shape = 'u8[8192]{0}', space=vmem, size = 0x2000, scoped, tag = 'input window, operand 0, single buffered']
    #allocation3 [shape = 's32[1]{0}', space=sflag, size = 0x4, scoped, tag = 'scoped memory for tpu_custom_call.1']
    #allocation4 [shape = 's32[1]{0}', space=sflag, size = 0x4, scoped, tag = 'scoped memory for tpu_custom_call.1']
    #allocation5 [shape = 's32[1]{0}', space=sflag, size = 0x4, scoped, tag = 'scoped memory for tpu_custom_call.1']
    #allocation6 [shape = 'u8[8192]{0}', space=vmem, size = 0x2000, scoped, tag = 'output window, operand 0, single buffered']
    #allocation7 [shape = 'u8[512]{0}', space=smem, size = 0x200, scoped, tag = 'output window, operand 1, single buffered']
    %8 = vsyncpa [#allocation3], 0
    %9 = vsyncpa [#allocation4], 0
    %10 = vsyncpa [#allocation5], 0
    // Predicated region
    $region2: #{tpu_custom_call.1} parent=1 // pred_check
      _
    $region3: #{tpu_custom_call.1} parent=1 // pred_check_branch
      %12 = sbr.rel (0) target = $region5
    $region4: #{tpu_custom_call.1} parent=1 // pred_region
      %s14 = ssub.s32 256, 256
      %15 = vsyncadd [#allocation3], %s14
      %s16 = sshll.u32 [#allocation2], 4
      %s17 = int_to_ptr.vmem [resolvable:$true] %s16
      %22 = dma.hbm_to_vmem [thread:$0]  %s0, 256, %s17, [#allocation3], 128, 128, 8
    $region5: #{tpu_custom_call.1} parent=1 // pred_fallthru
      _
    // Predicated region
    $region6: #{tpu_custom_call.1} parent=1 // pred_check
      _
    $region7: #{tpu_custom_call.1} parent=1 // pred_check_branch
      %24 = sbr.rel (0) target = $region9
    $region8: #{tpu_custom_call.1} parent=1 // pred_region
      %25 = dma.done [#allocation3], 256
    $region9: #{tpu_custom_call.1} parent=1 // pred_fallthru
      _
    %v26 = vld [vmem:[#allocation2] sm:$0xff]
    %v27 = vld [vmem:[#allocation2 + $0x8] sm:$0xff]
    %v28 = vand.u32 2147483647, %v26
    %v29 = vand.u32 2147483647, %v27
    %v30 = vmax.f32 %v28, %v29
    %31 = vmax.xlane.f32.xlu0 %v30
    %v32 = vpop.xlane.xlu0 %31
    %v33 = vrot.slane %v32, 4
    %v34 = vmax.f32 %v32, %v33
    %v35 = vrot.slane %v34, 2
    %v36 = vmax.f32 %v34, %v35
    %v37 = vrot.slane %v36, 1
    %v38 = vmax.f32 %v36, %v37
    %s39 = vtos %v38
    %s40 = scalar_lea.smem [#allocation7], 0
    %41 = sst [smem:[%s40]] %s39
    %s42 = smax.f32 %s39, 1e-30
    %v43 = vstv %s42
    %v44 = vrcp.pop %v43
    %s45 = vtos %v44
    %s46 = smul.f32 15.0, %s45
    %v47 = vrcp.pop 15.0
    %s48 = vtos %v47
    %s49 = smul.f32 %s42, %s48
    %v50 = vmax.f32 %v26, 0.0
    %v51 = vmax.f32 %v27, 0.0
    %v52 = vstv %s42
    %v53 = vmin.f32 %v52, %v50
    %v54 = vmin.f32 %v52, %v51
    %v55 = vstv %s46
    %v56 = vmul.f32 %v53, %v55
    %v57 = vmul.f32 %v54, %v55
    %v58 = vadd.f32 %v56, 0.5
    %v59 = vadd.f32 %v57, 0.5
    %v60 = vfloor.f32 %v58
    %v61 = vfloor.f32 %v59
    %v62 = vstv %s49
    %v63 = vmul.f32 %v60, %v62
    %v64 = vmul.f32 %v61, %v62
    %65 = vst [vmem:[#allocation6] sm:$0xff] %v63
    %66 = vst [vmem:[#allocation6 + $0x8] sm:$0xff] %v64
    // Predicated region
    $region10: #{tpu_custom_call.1} parent=1 // pred_check
      _
    $region11: #{tpu_custom_call.1} parent=1 // pred_check_branch
      %68 = sbr.rel (0) target = $region13
    $region12: #{tpu_custom_call.1} parent=1 // pred_region
      %s70 = ssub.s32 256, 256
      %71 = vsyncadd [#allocation4], %s70
      %s72 = sshll.u32 [#allocation6], 4
      %s73 = int_to_ptr.vmem [resolvable:$true] %s72
      %78 = dma.vmem_to_hbm [thread:$0]  %s73, 256, %s1, [#allocation4], 128, 128, 8
    $region13: #{tpu_custom_call.1} parent=1 // pred_fallthru
      _
    // Predicated region
    $region14: #{tpu_custom_call.1} parent=1 // pred_check
      _
    $region15: #{tpu_custom_call.1} parent=1 // pred_check_branch
      %80 = sbr.rel (0) target = $region17
    $region16: #{tpu_custom_call.1} parent=1 // pred_region
      %s82 = ssub.s32 16, 16
      %83 = vsyncadd [#allocation5], %s82
      %86 = dma.smem_to_hbm [#allocation7], 16, %s2, [#allocation5]
    $region17: #{tpu_custom_call.1} parent=1 // pred_fallthru
      _
    // Predicated region
    $region18: #{tpu_custom_call.1} parent=1 // pred_check
      _
    $region19: #{tpu_custom_call.1} parent=1 // pred_check_branch
      %88 = sbr.rel (0) target = $region21
    $region20: #{tpu_custom_call.1} parent=1 // pred_region
      %89 = dma.done [#allocation4], 256
    $region21: #{tpu_custom_call.1} parent=1 // pred_fallthru
      _
    // Predicated region
    $region22: #{tpu_custom_call.1} parent=1 // pred_check
      _
    $region23: #{tpu_custom_call.1} parent=1 // pred_check_branch
      %91 = sbr.rel (0) target = $region25
    $region24: #{tpu_custom_call.1} parent=1 // pred_region
      %92 = dma.done [#allocation5], 16
    $region25: #{tpu_custom_call.1} parent=1 // pred_fallthru
      _
    %93 = sfence
    %94 = vsyncpa [#allocation3], 1
    %95 = vsyncpa [#allocation4], 1
    %96 = vsyncpa [#allocation5], 1

</llo_original>
